<compile_context>
chip_gen: v5e
topology: v5e:2x2
jax: 0.10.0
libtpu: 0.0.40
codegen_flags: <defaults>
</compile_context>

<pallas_src>
import jax
import jax.numpy as jnp
from jax import lax
from jax.experimental import pallas as pl
from jax.experimental.pallas import tpu as pltpu

# ---- static config (small shapes consistent with an image observation) ----
N, C_IN, H, W = 2, 4, 16, 16          # obs: (N, C, H, W)
C_OUT, KH, KW = 8, 3, 3               # Conv2d(C_IN, C_OUT, 3), valid padding
H_OUT, W_OUT = H - KH + 1, W - KW + 1
HW = H_OUT * W_OUT                    # 196
HW_PAD = 256                          # lane-aligned (multiple of 128)
K = KH * KW * C_IN                    # 36
FLAT = C_OUT * HW                     # 1568: PyTorch nn.Flatten dim
FLAT_PAD = C_OUT * HW_PAD             # 2048: padded flatten dim used in-kernel
CNN_FLATTEN_DIM = 32                  # cnn_flatten_dim
RANGE_SIZE = 255.0                    # np.max(high) - np.min(low)


# ------------------------------ Pallas kernel -------------------------------

def fused_encoder_kernel(patch_ref, wconv_ref, bconv_ref, wfc_ref, bfc_ref,
                         o_ref, f_ref):
    # patch_ref: (K, n*HW_PAD)  uint8 im2col patches (raw; /range folded into wconv)
    # wconv_ref: (C_OUT, K)     f32 conv weight, pre-scaled by 1/range_size
    # bconv_ref: (C_OUT, 1)     f32 conv bias
    # wfc_ref:   (D, FLAT_PAD)  bf16 fc weight, native (out,in) layout, hw zero-padded
    # bfc_ref:   (1, D)         f32 fc bias
    # o_ref:     (n, D)         f32 output
    # f_ref:     (n, FLAT_PAD)  f32 VMEM scratch: flattened conv activations
    n_batch = o_ref.shape[0]
    c_out = wconv_ref.shape[0]

    # Conv for the whole batch as ONE matmul (C_OUT, K) @ (K, n*HW_PAD).
    # uint8 -> i32 (zero-extend) -> f32; the /255 preprocess is folded into wconv.
    x = patch_ref[...].astype(jnp.int32).astype(jnp.float32)
    y = jnp.dot(wconv_ref[...], x, preferred_element_type=jnp.float32)
    y = jnp.maximum(y + bconv_ref[...], 0.0)            # cnn activation: ReLU

    # Realize PyTorch's channel-major nn.Flatten(): scatter each conv-channel
    # row into the (n, C_OUT*HW_PAD) slab. All slices are static and the lane
    # offsets (multiples of HW_PAD=256) are 128-aligned -> unmasked stores.
    for n in range(n_batch):                             # static unroll (n tiny)
        y_n = y[:, n * HW_PAD:(n + 1) * HW_PAD]          # (C_OUT, HW_PAD)
        for c in range(c_out):                           # static unroll (C_OUT=8)
            f_ref[n:n + 1, c * HW_PAD:(c + 1) * HW_PAD] = y_n[c:c + 1, :]

    # FC as ONE big-K contraction: (n, FLAT_PAD) x (D, FLAT_PAD)^T with bf16
    # operands and f32 accumulation on the MXU. Padded columns of f hold
    # relu(conv_bias) but the matching fc-weight columns are zero, so they
    # contribute nothing.
    f = f_ref[...].astype(jnp.bfloat16)
    out = lax.dot_general(f, wfc_ref[...],
                          dimension_numbers=(((1,), (1,)), ((), ())),
                          preferred_element_type=jnp.float32)
    o_ref[...] = jnp.maximum(out + bfc_ref[...], 0.0)    # fc activation: ReLU


# --------------------------------- wrapper ----------------------------------

def _im2col_kmajor(obs):
    # obs: (n, C_IN, H, W), any dtype (kept as-is; uint8 -> 4x less HBM traffic)
    # -> (K, n*HW_PAD) with K index = (kh*KW + kw)*C_IN + cin and
    #    column index = n*HW_PAD + hw  (hw zero-padded 196 -> 256).
    n = obs.shape[0]
    cols = []
    for kh in range(KH):
        for kw in range(KW):
            cols.append(
                obs[:, :, kh:kh + H_OUT, kw:kw + W_OUT].reshape(n, C_IN, HW))
    p = jnp.stack(cols, axis=1).reshape(n, K, HW)        # (n, K, HW)
    p = jnp.pad(p, ((0, 0), (0, 0), (0, HW_PAD - HW)))   # zero-pad hw -> HW_PAD
    return jnp.transpose(p, (1, 0, 2)).reshape(K, n * HW_PAD)


def prepare_encoder_params(conv_w, conv_b, fc_w, fc_b):
    """One-time weight preparation (hoisted out of the per-call jit).

    conv_w: (C_OUT, C_IN, KH, KW), conv_b: (C_OUT,)
    fc_w:   (D, C_OUT*HW),         fc_b:   (D,)
    """
    # conv weight -> (C_OUT, K), K = (kh*KW+kw)*C_IN + cin; fold 1/range_size.
    wconv = (jnp.transpose(conv_w, (0, 2, 3, 1)).reshape(C_OUT, K)
             * (1.0 / RANGE_SIZE)).astype(jnp.float32)
    bconv = conv_b.reshape(C_OUT, 1).astype(jnp.float32)
    # fc weight stays in native PyTorch (out, in) layout (lane-dense); only the
    # per-channel hw axis is zero-padded to HW_PAD so in-kernel flatten offsets
    # are 128-lane aligned. bf16 halves the dominant weight DMA.
    wfc = fc_w.reshape(CNN_FLATTEN_DIM, C_OUT, HW)
    wfc = jnp.pad(wfc, ((0, 0), (0, 0), (0, HW_PAD - HW)))
    wfc = wfc.reshape(CNN_FLATTEN_DIM, FLAT_PAD).astype(jnp.bfloat16)
    bfc = fc_b.reshape(1, CNN_FLATTEN_DIM).astype(jnp.float32)
    return wconv, bconv, wfc, bfc


@jax.jit
def flattened_cnn_encoder(obs, wconv, bconv, wfc, bfc):
    # obs: (n, C, H, W) or (C, H, W), typically uint8 image observations.
    if obs.ndim == 3:                                    # preprocess: unsqueeze(0)
        obs = obs[None]
    n = obs.shape[0]
    patches = _im2col_kmajor(obs)                        # (K, n*HW_PAD), uint8

    # TODO(synk): for production batch sizes (RL vectorized envs) on v7x, add a
    # batch grid axis with dimension_semantics=("parallel",) to use both
    # TensorCores; at n=2 the grid-less single call is faster.
    return pl.pallas_call(
        fused_encoder_kernel,
        out_shape=jax.ShapeDtypeStruct((n, CNN_FLATTEN_DIM), jnp.float32),
        scratch_shapes=[pltpu.VMEM((n, FLAT_PAD), jnp.float32)],
    )(patches, wconv, bconv, wfc, bfc)


# --------------------------- pure-JAX reference -----------------------------

def reference(obs, conv_w, conv_b, fc_w, fc_b):
    x = obs.astype(jnp.float32) / RANGE_SIZE
    y = lax.conv_general_dilated(
        x, conv_w, window_strides=(1, 1), padding="VALID",
        dimension_numbers=("NCHW", "OIHW", "NCHW"))
    y = jnp.maximum(y + conv_b[None, :, None, None], 0.0)
    f = y.reshape(obs.shape[0], -1)
    return jnp.maximum(f @ fc_w.T + fc_b[None, :], 0.0)


if __name__ == "__main__":
    key = jax.random.PRNGKey(0)
    k_obs, k_cw, k_cb, k_fw, k_fb = jax.random.split(key, 5)

    # deterministic synthetic parameters (shapes follow the module's __init__)
    # TODO(synk): orthogonal init of the Linear is an init-time detail, not a
    # forward-pass op; plain Gaussian init used instead.
    obs = jax.random.randint(k_obs, (N, C_IN, H, W), 0, 256,
                             dtype=jnp.int32).astype(jnp.uint8)
    conv_w = 0.1 * jax.random.normal(k_cw, (C_OUT, C_IN, KH, KW), jnp.float32)
    conv_b = 0.1 * jax.random.normal(k_cb, (C_OUT,), jnp.float32)
    fc_w = 0.05 * jax.random.normal(k_fw, (CNN_FLATTEN_DIM, FLAT), jnp.float32)
    fc_b = 0.05 * jax.random.normal(k_fb, (CNN_FLATTEN_DIM,), jnp.float32)

    # one-time weight prep (kept out of the per-call forward)
    params = prepare_encoder_params(conv_w, conv_b, fc_w, fc_b)

    out = flattened_cnn_encoder(obs, *params)
    out = jax.block_until_ready(out)

    ref = reference(obs, conv_w, conv_b, fc_w, fc_b)
    assert out.shape == (N, CNN_FLATTEN_DIM), out.shape
    max_err = float(jnp.max(jnp.abs(out - ref)))
    # tolerance relaxed vs f32-only version: fc weights are stored/fed in bf16
    assert jnp.allclose(out, ref, atol=2e-2, rtol=2e-2), max_err
    print("KERNEL_OK")
</pallas_src>

<mosaic_0001>
module attributes {stable_mosaic.version = 11 : i64} {
  func.func @fused_encoder_kernel(%arg0: memref<36x512xi8, #tpu.memory_space<vmem>>, %arg1: memref<8x36xf32, #tpu.memory_space<vmem>>, %arg2: memref<8x1xf32, #tpu.memory_space<vmem>>, %arg3: memref<32x2048xbf16, #tpu.memory_space<vmem>>, %arg4: memref<1x32xf32, #tpu.memory_space<vmem>>, %arg5: memref<2x32xf32, #tpu.memory_space<vmem>>, %arg6: memref<2x2048xf32, #tpu.memory_space<vmem>>) attributes {dimension_semantics = [], scalar_prefetch = 0 : i64, scratch_operands = 1 : i64, tpu.core_type = #tpu.core_type<tc>} {
    %c0 = arith.constant 0 : index
    %c0_0 = arith.constant 0 : index
    %0 = vector.load %arg0[%c0, %c0_0] : memref<36x512xi8, #tpu.memory_space<vmem>>, vector<36x512xi8>
    %1 = arith.extui %0 : vector<36x512xi8> to vector<36x512xi32>
    %2 = arith.sitofp %1 : vector<36x512xi32> to vector<36x512xf32>
    %c0_1 = arith.constant 0 : index
    %c0_2 = arith.constant 0 : index
    %3 = vector.load %arg1[%c0_1, %c0_2] : memref<8x36xf32, #tpu.memory_space<vmem>>, vector<8x36xf32>
    %cst = arith.constant dense<0.000000e+00> : vector<8x512xf32>
    %4 = tpu.matmul %3, %2, %cst {dimension_numbers = #tpu.dot_dimension_numbers<[1], [0], [0], [1], [0, 0, 1, 1], [], []>} : vector<8x36xf32>, vector<36x512xf32>, vector<8x512xf32> -> vector<8x512xf32>
    %c0_3 = arith.constant 0 : index
    %c0_4 = arith.constant 0 : index
    %5 = vector.load %arg2[%c0_3, %c0_4] : memref<8x1xf32, #tpu.memory_space<vmem>>, vector<8x1xf32>
    %6 = vector.broadcast %5 : vector<8x1xf32> to vector<8x512xf32>
    %7 = arith.addf %4, %6 : vector<8x512xf32>
    %cst_5 = arith.constant 0.000000e+00 : f32
    %8 = vector.broadcast %cst_5 : f32 to vector<8x512xf32>
    %9 = arith.maximumf %7, %8 : vector<8x512xf32>
    %10 = vector.extract_strided_slice %9 {offsets = [0, 0], sizes = [8, 256], strides = [1, 1]} : vector<8x512xf32> to vector<8x256xf32>
    %11 = vector.extract_strided_slice %10 {offsets = [0, 0], sizes = [1, 256], strides = [1, 1]} : vector<8x256xf32> to vector<1x256xf32>
    %c0_6 = arith.constant 0 : index
    %c0_7 = arith.constant 0 : index
    %12 = vector.load %arg6[%c0_6, %c0_7] : memref<2x2048xf32, #tpu.memory_space<vmem>>, vector<1x256xf32>
    tpu.vector_store %arg6[%c0_6, %c0_7], %11 {strides = array<i32>} : memref<2x2048xf32, #tpu.memory_space<vmem>>, vector<1x256xf32>,
    %13 = vector.extract_strided_slice %10 {offsets = [1, 0], sizes = [1, 256], strides = [1, 1]} : vector<8x256xf32> to vector<1x256xf32>
    %c0_8 = arith.constant 0 : index
    %c256 = arith.constant 256 : index
    %14 = vector.load %arg6[%c0_8, %c256] : memref<2x2048xf32, #tpu.memory_space<vmem>>, vector<1x256xf32>
    tpu.vector_store %arg6[%c0_8, %c256], %13 {strides = array<i32>} : memref<2x2048xf32, #tpu.memory_space<vmem>>, vector<1x256xf32>,
    %15 = vector.extract_strided_slice %10 {offsets = [2, 0], sizes = [1, 256], strides = [1, 1]} : vector<8x256xf32> to vector<1x256xf32>
    %c0_9 = arith.constant 0 : index
    %c512 = arith.constant 512 : index
    %16 = vector.load %arg6[%c0_9, %c512] : memref<2x2048xf32, #tpu.memory_space<vmem>>, vector<1x256xf32>
    tpu.vector_store %arg6[%c0_9, %c512], %15 {strides = array<i32>} : memref<2x2048xf32, #tpu.memory_space<vmem>>, vector<1x256xf32>,
    %17 = vector.extract_strided_slice %10 {offsets = [3, 0], sizes = [1, 256], strides = [1, 1]} : vector<8x256xf32> to vector<1x256xf32>
    %c0_10 = arith.constant 0 : index
    %c768 = arith.constant 768 : index
    %18 = vector.load %arg6[%c0_10, %c768] : memref<2x2048xf32, #tpu.memory_space<vmem>>, vector<1x256xf32>
    tpu.vector_store %arg6[%c0_10, %c768], %17 {strides = array<i32>} : memref<2x2048xf32, #tpu.memory_space<vmem>>, vector<1x256xf32>,
    %19 = vector.extract_strided_slice %10 {offsets = [4, 0], sizes = [1, 256], strides = [1, 1]} : vector<8x256xf32> to vector<1x256xf32>
    %c0_11 = arith.constant 0 : index
    %c1024 = arith.constant 1024 : index
    %20 = vector.load %arg6[%c0_11, %c1024] : memref<2x2048xf32, #tpu.memory_space<vmem>>, vector<1x256xf32>
    tpu.vector_store %arg6[%c0_11, %c1024], %19 {strides = array<i32>} : memref<2x2048xf32, #tpu.memory_space<vmem>>, vector<1x256xf32>,
    %21 = vector.extract_strided_slice %10 {offsets = [5, 0], sizes = [1, 256], strides = [1, 1]} : vector<8x256xf32> to vector<1x256xf32>
    %c0_12 = arith.constant 0 : index
    %c1280 = arith.constant 1280 : index
    %22 = vector.load %arg6[%c0_12, %c1280] : memref<2x2048xf32, #tpu.memory_space<vmem>>, vector<1x256xf32>
    tpu.vector_store %arg6[%c0_12, %c1280], %21 {strides = array<i32>} : memref<2x2048xf32, #tpu.memory_space<vmem>>, vector<1x256xf32>,
    %23 = vector.extract_strided_slice %10 {offsets = [6, 0], sizes = [1, 256], strides = [1, 1]} : vector<8x256xf32> to vector<1x256xf32>
    %c0_13 = arith.constant 0 : index
    %c1536 = arith.constant 1536 : index
    %24 = vector.load %arg6[%c0_13, %c1536] : memref<2x2048xf32, #tpu.memory_space<vmem>>, vector<1x256xf32>
    tpu.vector_store %arg6[%c0_13, %c1536], %23 {strides = array<i32>} : memref<2x2048xf32, #tpu.memory_space<vmem>>, vector<1x256xf32>,
    %25 = vector.extract_strided_slice %10 {offsets = [7, 0], sizes = [1, 256], strides = [1, 1]} : vector<8x256xf32> to vector<1x256xf32>
    %c0_14 = arith.constant 0 : index
    %c1792 = arith.constant 1792 : index
    %26 = vector.load %arg6[%c0_14, %c1792] : memref<2x2048xf32, #tpu.memory_space<vmem>>, vector<1x256xf32>
    tpu.vector_store %arg6[%c0_14, %c1792], %25 {strides = array<i32>} : memref<2x2048xf32, #tpu.memory_space<vmem>>, vector<1x256xf32>,
    %27 = vector.extract_strided_slice %9 {offsets = [0, 256], sizes = [8, 256], strides = [1, 1]} : vector<8x512xf32> to vector<8x256xf32>
    %28 = vector.extract_strided_slice %27 {offsets = [0, 0], sizes = [1, 256], strides = [1, 1]} : vector<8x256xf32> to vector<1x256xf32>
    %c1 = arith.constant 1 : index
    %c0_15 = arith.constant 0 : index
    %29 = vector.load %arg6[%c1, %c0_15] : memref<2x2048xf32, #tpu.memory_space<vmem>>, vector<1x256xf32>
    tpu.vector_store %arg6[%c1, %c0_15], %28 {strides = array<i32>} : memref<2x2048xf32, #tpu.memory_space<vmem>>, vector<1x256xf32>,
    %30 = vector.extract_strided_slice %27 {offsets = [1, 0], sizes = [1, 256], strides = [1, 1]} : vector<8x256xf32> to vector<1x256xf32>
    %c1_16 = arith.constant 1 : index
    %c256_17 = arith.constant 256 : index
    %31 = vector.load %arg6[%c1_16, %c256_17] : memref<2x2048xf32, #tpu.memory_space<vmem>>, vector<1x256xf32>
    tpu.vector_store %arg6[%c1_16, %c256_17], %30 {strides = array<i32>} : memref<2x2048xf32, #tpu.memory_space<vmem>>, vector<1x256xf32>,
    %32 = vector.extract_strided_slice %27 {offsets = [2, 0], sizes = [1, 256], strides = [1, 1]} : vector<8x256xf32> to vector<1x256xf32>
    %c1_18 = arith.constant 1 : index
    %c512_19 = arith.constant 512 : index
    %33 = vector.load %arg6[%c1_18, %c512_19] : memref<2x2048xf32, #tpu.memory_space<vmem>>, vector<1x256xf32>
    tpu.vector_store %arg6[%c1_18, %c512_19], %32 {strides = array<i32>} : memref<2x2048xf32, #tpu.memory_space<vmem>>, vector<1x256xf32>,
    %34 = vector.extract_strided_slice %27 {offsets = [3, 0], sizes = [1, 256], strides = [1, 1]} : vector<8x256xf32> to vector<1x256xf32>
    %c1_20 = arith.constant 1 : index
    %c768_21 = arith.constant 768 : index
    %35 = vector.load %arg6[%c1_20, %c768_21] : memref<2x2048xf32, #tpu.memory_space<vmem>>, vector<1x256xf32>
    tpu.vector_store %arg6[%c1_20, %c768_21], %34 {strides = array<i32>} : memref<2x2048xf32, #tpu.memory_space<vmem>>, vector<1x256xf32>,
    %36 = vector.extract_strided_slice %27 {offsets = [4, 0], sizes = [1, 256], strides = [1, 1]} : vector<8x256xf32> to vector<1x256xf32>
    %c1_22 = arith.constant 1 : index
    %c1024_23 = arith.constant 1024 : index
    %37 = vector.load %arg6[%c1_22, %c1024_23] : memref<2x2048xf32, #tpu.memory_space<vmem>>, vector<1x256xf32>
    tpu.vector_store %arg6[%c1_22, %c1024_23], %36 {strides = array<i32>} : memref<2x2048xf32, #tpu.memory_space<vmem>>, vector<1x256xf32>,
    %38 = vector.extract_strided_slice %27 {offsets = [5, 0], sizes = [1, 256], strides = [1, 1]} : vector<8x256xf32> to vector<1x256xf32>
    %c1_24 = arith.constant 1 : index
    %c1280_25 = arith.constant 1280 : index
    %39 = vector.load %arg6[%c1_24, %c1280_25] : memref<2x2048xf32, #tpu.memory_space<vmem>>, vector<1x256xf32>
    tpu.vector_store %arg6[%c1_24, %c1280_25], %38 {strides = array<i32>} : memref<2x2048xf32, #tpu.memory_space<vmem>>, vector<1x256xf32>,
    %40 = vector.extract_strided_slice %27 {offsets = [6, 0], sizes = [1, 256], strides = [1, 1]} : vector<8x256xf32> to vector<1x256xf32>
    %c1_26 = arith.constant 1 : index
    %c1536_27 = arith.constant 1536 : index
    %41 = vector.load %arg6[%c1_26, %c1536_27] : memref<2x2048xf32, #tpu.memory_space<vmem>>, vector<1x256xf32>
    tpu.vector_store %arg6[%c1_26, %c1536_27], %40 {strides = array<i32>} : memref<2x2048xf32, #tpu.memory_space<vmem>>, vector<1x256xf32>,
    %42 = vector.extract_strided_slice %27 {offsets = [7, 0], sizes = [1, 256], strides = [1, 1]} : vector<8x256xf32> to vector<1x256xf32>
    %c1_28 = arith.constant 1 : index
    %c1792_29 = arith.constant 1792 : index
    %43 = vector.load %arg6[%c1_28, %c1792_29] : memref<2x2048xf32, #tpu.memory_space<vmem>>, vector<1x256xf32>
    tpu.vector_store %arg6[%c1_28, %c1792_29], %42 {strides = array<i32>} : memref<2x2048xf32, #tpu.memory_space<vmem>>, vector<1x256xf32>,
    %c0_30 = arith.constant 0 : index
    %c0_31 = arith.constant 0 : index
    %44 = vector.load %arg6[%c0_30, %c0_31] : memref<2x2048xf32, #tpu.memory_space<vmem>>, vector<2x2048xf32>
    %45 = arith.truncf %44 : vector<2x2048xf32> to vector<2x2048xbf16>
    %c0_32 = arith.constant 0 : index
    %c0_33 = arith.constant 0 : index
    %46 = vector.load %arg3[%c0_32, %c0_33] : memref<32x2048xbf16, #tpu.memory_space<vmem>>, vector<32x2048xbf16>
    %cst_34 = arith.constant dense<0.000000e+00> : vector<2x32xf32>
    %47 = tpu.matmul %45, %46, %cst_34 {dimension_numbers = #tpu.dot_dimension_numbers<[1], [1], [0], [0], [0, 0, 1, 0], [], []>} : vector<2x2048xbf16>, vector<32x2048xbf16>, vector<2x32xf32> -> vector<2x32xf32>
    %c0_35 = arith.constant 0 : index
    %c0_36 = arith.constant 0 : index
    %48 = vector.load %arg4[%c0_35, %c0_36] : memref<1x32xf32, #tpu.memory_space<vmem>>, vector<1x32xf32>
    %49 = vector.broadcast %48 : vector<1x32xf32> to vector<2x32xf32>
    %50 = arith.addf %47, %49 : vector<2x32xf32>
    %cst_37 = arith.constant 0.000000e+00 : f32
    %51 = vector.broadcast %cst_37 : f32 to vector<2x32xf32>
    %52 = arith.maximumf %50, %51 : vector<2x32xf32>
    %c0_38 = arith.constant 0 : index
    %c0_39 = arith.constant 0 : index
    %53 = vector.load %arg5[%c0_38, %c0_39] : memref<2x32xf32, #tpu.memory_space<vmem>>, vector<2x32xf32>
    tpu.vector_store %arg5[%c0_38, %c0_39], %52 {strides = array<i32>} : memref<2x32xf32, #tpu.memory_space<vmem>>, vector<2x32xf32>,
    return
  }
}

</mosaic_0001>

<llo_original>
// kernel: flattened_cnn_encoder.1
$region0: #{flattened_cnn_encoder.1}
  #allocation0 [shape = 'u32[]', space=smem, size = 0x4, offset = 0x4, fixed_abs, tag = 'smem constant byte address 0x4 - core index']
  #allocation1 [shape = 'u32[72,128]{1,0:T(1,128)}', space=vmem, size = 0x9000, scoped, tag = 'internal scratch']
  #allocation2 [shape = 'f32[2,2048]{1,0:T(2,128)}', space=vmem, size = 0x4000, scoped, tag = 'scratch operand']
  %s0 = inlined_call_operand.vmem [shape: u8[36,512], index: 0, kind: input, shape index: {}]
  %s1 = inlined_call_operand.vmem [shape: f32[8,36], index: 1, kind: input, shape index: {}]
  %s2 = inlined_call_operand.vmem [shape: f32[8,1], index: 2, kind: input, shape index: {}]
  %s3 = inlined_call_operand.vmem [shape: bf16[32,2048], index: 3, kind: input, shape index: {}]
  %s4 = inlined_call_operand.vmem [shape: f32[1,32], index: 4, kind: input, shape index: {}]
  %s5 = inlined_call_operand.hbm [shape: f32[2,32], index: 5, kind: output, shape index: {}]
  %s6 = sld [smem:[#allocation0]]
  $region30: #{flattened_cnn_encoder.1} parent=0
    _
  %s8 = ssub.s32 1, %s6
  %s9 = scalar_select 0, %s8, %s6
  $region1: #{flattened_cnn_encoder.1} parent=0
    #allocation3 [shape = 'u8[1024]{0}', space=vmem, size = 0x400, scoped, tag = 'output window, operand 0, single buffered']
    #allocation4 [shape = 's32[1]{0}', space=sflag, size = 0x4, scoped, tag = 'scoped memory for flattened_cnn_encoder.1']
    %10 = vsyncpa [#allocation4], 0
    // Predicated region
    $region2: #{flattened_cnn_encoder.1} parent=1 // pred_check
      _
    $region3: #{flattened_cnn_encoder.1} parent=1 // pred_check_branch
      %12 = sbr.rel (0) target = $region5
    $region4: #{flattened_cnn_encoder.1} parent=1 // pred_region
      _
    $region5: #{flattened_cnn_encoder.1} parent=1 // pred_fallthru
      _
    // Predicated region
    $region6: #{flattened_cnn_encoder.1} parent=1 // pred_check
      _
    $region7: #{flattened_cnn_encoder.1} parent=1 // pred_check_branch
      %14 = sbr.rel (0) target = $region9
    $region8: #{flattened_cnn_encoder.1} parent=1 // pred_region
      _
    $region9: #{flattened_cnn_encoder.1} parent=1 // pred_fallthru
      _
    // Predicated region
    $region10: #{flattened_cnn_encoder.1} parent=1 // pred_check
      _
    $region11: #{flattened_cnn_encoder.1} parent=1 // pred_check_branch
      %16 = sbr.rel (0) target = $region13
    $region12: #{flattened_cnn_encoder.1} parent=1 // pred_region
      _
    $region13: #{flattened_cnn_encoder.1} parent=1 // pred_fallthru
      _
    // Predicated region
    $region14: #{flattened_cnn_encoder.1} parent=1 // pred_check
      _
    $region15: #{flattened_cnn_encoder.1} parent=1 // pred_check_branch
      %18 = sbr.rel (0) target = $region17
    $region16: #{flattened_cnn_encoder.1} parent=1 // pred_region
      _
    $region17: #{flattened_cnn_encoder.1} parent=1 // pred_fallthru
      _
    // Predicated region
    $region18: #{flattened_cnn_encoder.1} parent=1 // pred_check
      _
    $region19: #{flattened_cnn_encoder.1} parent=1 // pred_check_branch
      %20 = sbr.rel (0) target = $region21
    $region20: #{flattened_cnn_encoder.1} parent=1 // pred_region
      _
    $region21: #{flattened_cnn_encoder.1} parent=1 // pred_fallthru
      _
    %v22 = vld [vmem:[%s0] sm:$0xff]
    %v23 = vld [vmem:[%s0 + $0x8] sm:$0xff]
    %v24 = vld [vmem:[%s0 + $0x10] sm:$0xff]
    %v25 = vld [vmem:[%s0 + $0x18] sm:$0xff]
    %v26 = vld [vmem:[%s0 + $0x20] sm:$0x55]
    %v27 = vunpack.c.0.s8 %v22
    %v28 = vunpack.c.1.s8 %v22
    %v29 = vunpack.c.2.s8 %v22
    %v30 = vunpack.c.3.s8 %v22
    %v31 = vunpack.c.0.s8 %v23
    %v32 = vunpack.c.1.s8 %v23
    %v33 = vunpack.c.2.s8 %v23
    %v34 = vunpack.c.3.s8 %v23
    %v35 = vunpack.c.0.s8 %v24
    %v36 = vunpack.c.1.s8 %v24
    %v37 = vunpack.c.2.s8 %v24
    %v38 = vunpack.c.3.s8 %v24
    %v39 = vunpack.c.0.s8 %v25
    %v40 = vunpack.c.1.s8 %v25
    %v41 = vunpack.c.2.s8 %v25
    %v42 = vunpack.c.3.s8 %v25
    %v43 = vunpack.c.0.s8 %v26
    %v44 = vunpack.c.1.s8 %v26
    %v45 = vunpack.c.2.s8 %v26
    %v46 = vunpack.c.3.s8 %v26
    %v47 = vand.u32 %v27, 255
    %v48 = vand.u32 %v28, 255
    %v49 = vand.u32 %v29, 255
    %v50 = vand.u32 %v30, 255
    %v51 = vand.u32 %v31, 255
    %v52 = vand.u32 %v32, 255
    %v53 = vand.u32 %v33, 255
    %v54 = vand.u32 %v34, 255
    %v55 = vand.u32 %v35, 255
    %v56 = vand.u32 %v36, 255
    %v57 = vand.u32 %v37, 255
    %v58 = vand.u32 %v38, 255
    %v59 = vand.u32 %v39, 255
    %v60 = vand.u32 %v40, 255
    %v61 = vand.u32 %v41, 255
    %v62 = vand.u32 %v42, 255
    %v63 = vand.u32 %v43, 255
    %v64 = vand.u32 %v44, 255
    %v65 = vand.u32 %v45, 255
    %v66 = vand.u32 %v46, 255
    %v67 = vcvt.s32.f32 %v47
    %v68 = vcvt.s32.f32 %v48
    %v69 = vcvt.s32.f32 %v49
    %v70 = vcvt.s32.f32 %v50
    %v71 = vcvt.s32.f32 %v51
    %v72 = vcvt.s32.f32 %v52
    %v73 = vcvt.s32.f32 %v53
    %v74 = vcvt.s32.f32 %v54
    %v75 = vcvt.s32.f32 %v55
    %v76 = vcvt.s32.f32 %v56
    %v77 = vcvt.s32.f32 %v57
    %v78 = vcvt.s32.f32 %v58
    %v79 = vcvt.s32.f32 %v59
    %v80 = vcvt.s32.f32 %v60
    %v81 = vcvt.s32.f32 %v61
    %v82 = vcvt.s32.f32 %v62
    %v83 = vcvt.s32.f32 %v63
    %v84 = vcvt.s32.f32 %v64
    %v85 = vcvt.s32.f32 %v65
    %v86 = vcvt.s32.f32 %v66
    %v87 = vld [vmem:[%s1] sm:$0xff]
    %v88 = vld [vmem:[%s2] sm:$0xff]
    %90 = vset.pattern.permute.xlu0 0
    %91 = vperm.xlu0 %90, %v88
    %v92 = vpop.permute.xlu0 %91
    %vm94 = vcmask 293888
    %v96 = vsel %vm94, %v87, 0
    %vm98 = vcmask 1043456
    %v100 = vsel %vm98, %v83, 0
    %v103 = vsel %vm98, %v84, 0
    %v106 = vsel %vm98, %v85, 0
    %v109 = vsel %vm98, %v86, 0
    %111 = vmatpush.msra.mxu0 0.0
    %112 = vmatpush.msra.mxu0 0.0
    %113 = vmatpush.msra.mxu0 0.0
    %114 = vmatpush.msra.mxu0 0.0
    %115 = vmatpush.msra.mxu0 0.0
    %116 = vmatpush.msra.mxu0 0.0
    %117 = vmatpush.msra.mxu0 0.0
    %118 = vmatpush.msra.mxu0 0.0
    %119 = vmatpush.msra.mxu0 0.0
    %120 = vmatpush.msra.mxu0 0.0
    %121 = vmatpush.msra.mxu0 0.0
    %122 = vmatpush.msra.mxu0 %v100
    %123 = vmatpush.msra.mxu0 %v79
    %124 = vmatpush.msra.mxu0 %v75
    %125 = vmatpush.msra.mxu0 %v71
    %126 = vmatpush.msra.mxu0 %v67
    %127 = vmatmul.f32.gmra.mxu0 %v96
    %v128 = vpop.f32.mrf.mxu0
    %v129 = vadd.f32 %v92, %v128
    %130 = vdwg.mxu0
    %131 = vmatpush.msra.mxu0 0.0
    %132 = vmatpush.msra.mxu0 0.0
    %133 = vmatpush.msra.mxu0 0.0
    %134 = vmatpush.msra.mxu0 0.0
    %135 = vmatpush.msra.mxu0 0.0
    %136 = vmatpush.msra.mxu0 0.0
    %137 = vmatpush.msra.mxu0 0.0
    %138 = vmatpush.msra.mxu0 0.0
    %139 = vmatpush.msra.mxu0 0.0
    %140 = vmatpush.msra.mxu0 0.0
    %141 = vmatpush.msra.mxu0 0.0
    %142 = vmatpush.msra.mxu0 %v103
    %143 = vmatpush.msra.mxu0 %v80
    %144 = vmatpush.msra.mxu0 %v76
    %145 = vmatpush.msra.mxu0 %v72
    %146 = vmatpush.msra.mxu0 %v68
    %147 = vmatmul.f32.gmra.mxu0 %v96
    %v148 = vpop.f32.mrf.mxu0
    %v149 = vadd.f32 %v92, %v148
    %150 = vdwg.mxu0
    %151 = vmatpush.msra.mxu0 0.0
    %152 = vmatpush.msra.mxu0 0.0
    %153 = vmatpush.msra.mxu0 0.0
    %154 = vmatpush.msra.mxu0 0.0
    %155 = vmatpush.msra.mxu0 0.0
    %156 = vmatpush.msra.mxu0 0.0
    %157 = vmatpush.msra.mxu0 0.0
    %158 = vmatpush.msra.mxu0 0.0
    %159 = vmatpush.msra.mxu0 0.0
    %160 = vmatpush.msra.mxu0 0.0
    %161 = vmatpush.msra.mxu0 0.0
    %162 = vmatpush.msra.mxu0 %v106
    %163 = vmatpush.msra.mxu0 %v81
    %164 = vmatpush.msra.mxu0 %v77
    %165 = vmatpush.msra.mxu0 %v73
    %166 = vmatpush.msra.mxu0 %v69
    %167 = vmatmul.f32.gmra.mxu0 %v96
    %v168 = vpop.f32.mrf.mxu0
    %v169 = vadd.f32 %v92, %v168
    %170 = vdwg.mxu0
    %171 = vmatpush.msra.mxu0 0.0
    %172 = vmatpush.msra.mxu0 0.0
    %173 = vmatpush.msra.mxu0 0.0
    %174 = vmatpush.msra.mxu0 0.0
    %175 = vmatpush.msra.mxu0 0.0
    %176 = vmatpush.msra.mxu0 0.0
    %177 = vmatpush.msra.mxu0 0.0
    %178 = vmatpush.msra.mxu0 0.0
    %179 = vmatpush.msra.mxu0 0.0
    %180 = vmatpush.msra.mxu0 0.0
    %181 = vmatpush.msra.mxu0 0.0
    %182 = vmatpush.msra.mxu0 %v109
    %183 = vmatpush.msra.mxu0 %v82
    %184 = vmatpush.msra.mxu0 %v78
    %185 = vmatpush.msra.mxu0 %v74
    %186 = vmatpush.msra.mxu0 %v70
    %187 = vmatmul.f32.gmra.mxu0 %v96
    %v188 = vpop.f32.mrf.mxu0
    %v189 = vadd.f32 %v92, %v188
    %190 = vdwg.mxu0
    %v191 = vmax.f32 %v129, 0.0
    %v192 = vmax.f32 %v149, 0.0
    %v193 = vmax.f32 %v169, 0.0
    %v194 = vmax.f32 %v189, 0.0
    %v197 = vrot.slane %v192, 7
    %vm198 = vcmask 1040384
    %v199 = vsel %vm198, %v191, %v197
    %v201 = vlaneseq
    %vm202 = vcmp.ge.s32.totalorder %v201, 0
    %vm203 = vcmp.lt.s32.totalorder %v201, 256
    %vm204 = vmand %vm202, %vm203
    %205 = vst.msk [vmem:[#allocation2] ss:$2 sm:$0x3] %vm204, %v199
    %206 = vst [vmem:[#allocation1] sm:$0xff] %v191
    %207 = vst [vmem:[#allocation1 + $0x9] sm:$0xff] %v192
    %s208 = scalar_lea.vmem [#allocation1], 1
    %v209 = vld [vmem:[%s208] ss:$9 sm:$0xff]
    %s211 = scalar_lea.vmem [#allocation2], 4
    %212 = vst.msk [vmem:[%s211] ss:$2 sm:$0x3] %vm204, %v209
    %213 = vst [vmem:[#allocation1] sm:$0xff] %v191
    %214 = vst [vmem:[#allocation1 + $0x9] sm:$0xff] %v192
    %s215 = scalar_lea.vmem [#allocation1], 2
    %v216 = vld [vmem:[%s215] ss:$9 sm:$0xff]
    %s218 = scalar_lea.vmem [#allocation2], 8
    %219 = vst.msk [vmem:[%s218] ss:$2 sm:$0x3] %vm204, %v216
    %220 = vst [vmem:[#allocation1] sm:$0xff] %v191
    %221 = vst [vmem:[#allocation1 + $0x9] sm:$0xff] %v192
    %s222 = scalar_lea.vmem [#allocation1], 3
    %v223 = vld [vmem:[%s222] ss:$9 sm:$0xff]
    %s225 = scalar_lea.vmem [#allocation2], 12
    %226 = vst.msk [vmem:[%s225] ss:$2 sm:$0x3] %vm204, %v223
    %227 = vst [vmem:[#allocation1] sm:$0xff] %v191
    %228 = vst [vmem:[#allocation1 + $0x9] sm:$0xff] %v192
    %s229 = scalar_lea.vmem [#allocation1], 4
    %v230 = vld [vmem:[%s229] ss:$9 sm:$0xff]
    %s232 = scalar_lea.vmem [#allocation2], 16
    %233 = vst.msk [vmem:[%s232] ss:$2 sm:$0x3] %vm204, %v230
    %234 = vst [vmem:[#allocation1] sm:$0xff] %v191
    %235 = vst [vmem:[#allocation1 + $0x9] sm:$0xff] %v192
    %s236 = scalar_lea.vmem [#allocation1], 5
    %v237 = vld [vmem:[%s236] ss:$9 sm:$0xff]
    %s239 = scalar_lea.vmem [#allocation2], 20
    %240 = vst.msk [vmem:[%s239] ss:$2 sm:$0x3] %vm204, %v237
    %241 = vst [vmem:[#allocation1] sm:$0xff] %v191
    %242 = vst [vmem:[#allocation1 + $0x9] sm:$0xff] %v192
    %s243 = scalar_lea.vmem [#allocation1], 6
    %v244 = vld [vmem:[%s243] ss:$9 sm:$0xff]
    %s246 = scalar_lea.vmem [#allocation2], 24
    %247 = vst.msk [vmem:[%s246] ss:$2 sm:$0x3] %vm204, %v244
    %248 = vst [vmem:[#allocation1] sm:$0xff] %v191
    %249 = vst [vmem:[#allocation1 + $0x9] sm:$0xff] %v192
    %s250 = scalar_lea.vmem [#allocation1], 7
    %v251 = vld [vmem:[%s250] ss:$9 sm:$0xff]
    %s253 = scalar_lea.vmem [#allocation2], 28
    %254 = vst.msk [vmem:[%s253] ss:$2 sm:$0x3] %vm204, %v251
    %v257 = vrot.slane %v194, 7
    %v258 = vsel %vm198, %v193, %v257
    %s260 = scalar_lea.vmem [#allocation2], 1
    %261 = vst.msk [vmem:[%s260] ss:$2 sm:$0x3] %vm204, %v258
    %262 = vst [vmem:[#allocation1] sm:$0xff] %v193
    %263 = vst [vmem:[#allocation1 + $0x9] sm:$0xff] %v194
    %s264 = scalar_lea.vmem [#allocation1], 1
    %v265 = vld [vmem:[%s264] ss:$9 sm:$0xff]
    %s267 = scalar_lea.vmem [#allocation2], 5
    %268 = vst.msk [vmem:[%s267] ss:$2 sm:$0x3] %vm204, %v265
    %269 = vst [vmem:[#allocation1] sm:$0xff] %v193
    %270 = vst [vmem:[#allocation1 + $0x9] sm:$0xff] %v194
    %s271 = scalar_lea.vmem [#allocation1], 2
    %v272 = vld [vmem:[%s271] ss:$9 sm:$0xff]
    %s274 = scalar_lea.vmem [#allocation2], 9
    %275 = vst.msk [vmem:[%s274] ss:$2 sm:$0x3] %vm204, %v272
    %276 = vst [vmem:[#allocation1] sm:$0xff] %v193
    %277 = vst [vmem:[#allocation1 + $0x9] sm:$0xff] %v194
    %s278 = scalar_lea.vmem [#allocation1], 3
    %v279 = vld [vmem:[%s278] ss:$9 sm:$0xff]
    %s281 = scalar_lea.vmem [#allocation2], 13
    %282 = vst.msk [vmem:[%s281] ss:$2 sm:$0x3] %vm204, %v279
    %283 = vst [vmem:[#allocation1] sm:$0xff] %v193
    %284 = vst [vmem:[#allocation1 + $0x9] sm:$0xff] %v194
    %s285 = scalar_lea.vmem [#allocation1], 4
    %v286 = vld [vmem:[%s285] ss:$9 sm:$0xff]
    %s288 = scalar_lea.vmem [#allocation2], 17
    %289 = vst.msk [vmem:[%s288] ss:$2 sm:$0x3] %vm204, %v286
    %290 = vst [vmem:[#allocation1] sm:$0xff] %v193
    %291 = vst [vmem:[#allocation1 + $0x9] sm:$0xff] %v194
    %s292 = scalar_lea.vmem [#allocation1], 5
    %v293 = vld [vmem:[%s292] ss:$9 sm:$0xff]
    %s295 = scalar_lea.vmem [#allocation2], 21
    %296 = vst.msk [vmem:[%s295] ss:$2 sm:$0x3] %vm204, %v293
    %297 = vst [vmem:[#allocation1] sm:$0xff] %v193
    %298 = vst [vmem:[#allocation1 + $0x9] sm:$0xff] %v194
    %s299 = scalar_lea.vmem [#allocation1], 6
    %v300 = vld [vmem:[%s299] ss:$9 sm:$0xff]
    %s302 = scalar_lea.vmem [#allocation2], 25
    %303 = vst.msk [vmem:[%s302] ss:$2 sm:$0x3] %vm204, %v300
    %304 = vst [vmem:[#allocation1] sm:$0xff] %v193
    %305 = vst [vmem:[#allocation1 + $0x9] sm:$0xff] %v194
    %s306 = scalar_lea.vmem [#allocation1], 7
    %v307 = vld [vmem:[%s306] ss:$9 sm:$0xff]
    %s309 = scalar_lea.vmem [#allocation2], 29
    %310 = vst.msk [vmem:[%s309] ss:$2 sm:$0x3] %vm204, %v307
    %v311 = vld [vmem:[#allocation2] sm:$0xff]
    %v312 = vld [vmem:[#allocation2 + $0x8] sm:$0xff]
    %v313 = vld [vmem:[#allocation2 + $0x10] sm:$0xff]
    %v314 = vld [vmem:[#allocation2 + $0x18] sm:$0xff]
    %319 = vst [vmem:[#allocation1] ss:$4 sm:$0xff] %v311
    %s320 = scalar_lea.vmem [#allocation1], 32
    %321 = vst [vmem:[%s320] ss:$4 sm:$0xff] %v312
    %v322 = vld.sshfl [vmem:[#allocation1] sm:$0xff pattern:$0x73625140]
    %v323 = vld.sshfl [vmem:[#allocation1 + $0x8] sm:$0xff pattern:$0x73625140]
    %v324 = vld.sshfl [vmem:[#allocation1 + $0x10] sm:$0xff pattern:$0x73625140]
    %v325 = vld.sshfl [vmem:[#allocation1 + $0x18] sm:$0xff pattern:$0x73625140]
    %v326 = vld.sshfl [vmem:[#allocation1 + $0x20] sm:$0xff pattern:$0x73625140]
    %v327 = vld.sshfl [vmem:[#allocation1 + $0x28] sm:$0xff pattern:$0x73625140]
    %v328 = vld.sshfl [vmem:[#allocation1 + $0x30] sm:$0xff pattern:$0x73625140]
    %v329 = vld.sshfl [vmem:[#allocation1 + $0x38] sm:$0xff pattern:$0x73625140]
    %330 = vst [vmem:[#allocation1] ss:$4 sm:$0xff] %v313
    %331 = vst [vmem:[%s320] ss:$4 sm:$0xff] %v314
    %v332 = vld.sshfl [vmem:[#allocation1] sm:$0xff pattern:$0x73625140]
    %v333 = vld.sshfl [vmem:[#allocation1 + $0x8] sm:$0xff pattern:$0x73625140]
    %v334 = vld.sshfl [vmem:[#allocation1 + $0x10] sm:$0xff pattern:$0x73625140]
    %v335 = vld.sshfl [vmem:[#allocation1 + $0x18] sm:$0xff pattern:$0x73625140]
    %v336 = vld.sshfl [vmem:[#allocation1 + $0x20] sm:$0xff pattern:$0x73625140]
    %v337 = vld.sshfl [vmem:[#allocation1 + $0x28] sm:$0xff pattern:$0x73625140]
    %v338 = vld.sshfl [vmem:[#allocation1 + $0x30] sm:$0xff pattern:$0x73625140]
    %v339 = vld.sshfl [vmem:[#allocation1 + $0x38] sm:$0xff pattern:$0x73625140]
    %v356 = vpack.c.bf16 %v322, %v322
    %v357 = vpack.c.bf16 %v323, %v323
    %v358 = vpack.c.bf16 %v324, %v324
    %v359 = vpack.c.bf16 %v325, %v325
    %v360 = vpack.c.bf16 %v326, %v326
    %v361 = vpack.c.bf16 %v327, %v327
    %v362 = vpack.c.bf16 %v328, %v328
    %v363 = vpack.c.bf16 %v329, %v329
    %v364 = vpack.c.bf16 %v332, %v332
    %v365 = vpack.c.bf16 %v333, %v333
    %v366 = vpack.c.bf16 %v334, %v334
    %v367 = vpack.c.bf16 %v335, %v335
    %v368 = vpack.c.bf16 %v336, %v336
    %v369 = vpack.c.bf16 %v337, %v337
    %v370 = vpack.c.bf16 %v338, %v338
    %v371 = vpack.c.bf16 %v339, %v339
    %v372 = vld [vmem:[%s3] sm:$0xff]
    %v373 = vld [vmem:[%s3 + $0x8] sm:$0xff]
    %v374 = vld [vmem:[%s3 + $0x10] sm:$0xff]
    %v375 = vld [vmem:[%s3 + $0x18] sm:$0xff]
    %v376 = vld [vmem:[%s3 + $0x20] sm:$0xff]
    %v377 = vld [vmem:[%s3 + $0x28] sm:$0xff]
    %v378 = vld [vmem:[%s3 + $0x30] sm:$0xff]
    %v379 = vld [vmem:[%s3 + $0x38] sm:$0xff]
    %v380 = vld [vmem:[%s3 + $0x40] sm:$0xff]
    %v381 = vld [vmem:[%s3 + $0x48] sm:$0xff]
    %v382 = vld [vmem:[%s3 + $0x50] sm:$0xff]
    %v383 = vld [vmem:[%s3 + $0x58] sm:$0xff]
    %v384 = vld [vmem:[%s3 + $0x60] sm:$0xff]
    %v385 = vld [vmem:[%s3 + $0x68] sm:$0xff]
    %v386 = vld [vmem:[%s3 + $0x70] sm:$0xff]
    %v387 = vld [vmem:[%s3 + $0x78] sm:$0xff]
    %v388 = vld [vmem:[%s3 + $0x80] sm:$0xff]
    %v389 = vld [vmem:[%s3 + $0x88] sm:$0xff]
    %v390 = vld [vmem:[%s3 + $0x90] sm:$0xff]
    %v391 = vld [vmem:[%s3 + $0x98] sm:$0xff]
    %v392 = vld [vmem:[%s3 + $0xa0] sm:$0xff]
    %v393 = vld [vmem:[%s3 + $0xa8] sm:$0xff]
    %v394 = vld [vmem:[%s3 + $0xb0] sm:$0xff]
    %v395 = vld [vmem:[%s3 + $0xb8] sm:$0xff]
    %v396 = vld [vmem:[%s3 + $0xc0] sm:$0xff]
    %v397 = vld [vmem:[%s3 + $0xc8] sm:$0xff]
    %v398 = vld [vmem:[%s3 + $0xd0] sm:$0xff]
    %v399 = vld [vmem:[%s3 + $0xd8] sm:$0xff]
    %v400 = vld [vmem:[%s3 + $0xe0] sm:$0xff]
    %v401 = vld [vmem:[%s3 + $0xe8] sm:$0xff]
    %v402 = vld [vmem:[%s3 + $0xf0] sm:$0xff]
    %v403 = vld [vmem:[%s3 + $0xf8] sm:$0xff]
    %v404 = vld [vmem:[%s4] sm:$0x1]
    %v406 = vperm.slane %v404, 0
    %v440 = vunpack.c.l.b16 %v372
    %v441 = vunpack.c.h.b16 %v372
    %v442 = vunpack.c.l.b16 %v373
    %v443 = vunpack.c.h.b16 %v373
    %v444 = vunpack.c.l.b16 %v374
    %v445 = vunpack.c.h.b16 %v374
    %v446 = vunpack.c.l.b16 %v375
    %v447 = vunpack.c.h.b16 %v375
    %v448 = vunpack.c.l.b16 %v376
    %v449 = vunpack.c.h.b16 %v376
    %v450 = vunpack.c.l.b16 %v377
    %v451 = vunpack.c.h.b16 %v377
    %v452 = vunpack.c.l.b16 %v378
    %v453 = vunpack.c.h.b16 %v378
    %v454 = vunpack.c.l.b16 %v379
    %v455 = vunpack.c.h.b16 %v379
    %v456 = vunpack.c.l.b16 %v380
    %v457 = vunpack.c.h.b16 %v380
    %v458 = vunpack.c.l.b16 %v381
    %v459 = vunpack.c.h.b16 %v381
    %v460 = vunpack.c.l.b16 %v382
    %v461 = vunpack.c.h.b16 %v382
    %v462 = vunpack.c.l.b16 %v383
    %v463 = vunpack.c.h.b16 %v383
    %v464 = vunpack.c.l.b16 %v384
    %v465 = vunpack.c.h.b16 %v384
    %v466 = vunpack.c.l.b16 %v385
    %v467 = vunpack.c.h.b16 %v385
    %v468 = vunpack.c.l.b16 %v386
    %v469 = vunpack.c.h.b16 %v386
    %v470 = vunpack.c.l.b16 %v387
    %v471 = vunpack.c.h.b16 %v387
    %v472 = vunpack.c.l.b16 %v388
    %v473 = vunpack.c.h.b16 %v388
    %v474 = vunpack.c.l.b16 %v389
    %v475 = vunpack.c.h.b16 %v389
    %v476 = vunpack.c.l.b16 %v390
    %v477 = vunpack.c.h.b16 %v390
    %v478 = vunpack.c.l.b16 %v391
    %v479 = vunpack.c.h.b16 %v391
    %v480 = vunpack.c.l.b16 %v392
    %v481 = vunpack.c.h.b16 %v392
    %v482 = vunpack.c.l.b16 %v393
    %v483 = vunpack.c.h.b16 %v393
    %v484 = vunpack.c.l.b16 %v394
    %v485 = vunpack.c.h.b16 %v394
    %v486 = vunpack.c.l.b16 %v395
    %v487 = vunpack.c.h.b16 %v395
    %v488 = vunpack.c.l.b16 %v396
    %v489 = vunpack.c.h.b16 %v396
    %v490 = vunpack.c.l.b16 %v397
    %v491 = vunpack.c.h.b16 %v397
    %v492 = vunpack.c.l.b16 %v398
    %v493 = vunpack.c.h.b16 %v398
    %v494 = vunpack.c.l.b16 %v399
    %v495 = vunpack.c.h.b16 %v399
    %v496 = vunpack.c.l.b16 %v400
    %v497 = vunpack.c.h.b16 %v400
    %v498 = vunpack.c.l.b16 %v401
    %v499 = vunpack.c.h.b16 %v401
    %v500 = vunpack.c.l.b16 %v402
    %v501 = vunpack.c.h.b16 %v402
    %v502 = vunpack.c.l.b16 %v403
    %v503 = vunpack.c.h.b16 %v403
    %v504 = vpack.c.b16 %v456, %v440
    %v505 = vpack.c.b16 %v457, %v441
    %v506 = vpack.c.b16 %v458, %v442
    %v507 = vpack.c.b16 %v459, %v443
    %v508 = vpack.c.b16 %v460, %v444
    %v509 = vpack.c.b16 %v461, %v445
    %v510 = vpack.c.b16 %v462, %v446
    %v511 = vpack.c.b16 %v463, %v447
    %v512 = vpack.c.b16 %v464, %v448
    %v513 = vpack.c.b16 %v465, %v449
    %v514 = vpack.c.b16 %v466, %v450
    %v515 = vpack.c.b16 %v467, %v451
    %v516 = vpack.c.b16 %v468, %v452
    %v517 = vpack.c.b16 %v469, %v453
    %v518 = vpack.c.b16 %v470, %v454
    %v519 = vpack.c.b16 %v471, %v455
    %v520 = vpack.c.b16 %v488, %v472
    %v521 = vpack.c.b16 %v489, %v473
    %v522 = vpack.c.b16 %v490, %v474
    %v523 = vpack.c.b16 %v491, %v475
    %v524 = vpack.c.b16 %v492, %v476
    %v525 = vpack.c.b16 %v493, %v477
    %v526 = vpack.c.b16 %v494, %v478
    %v527 = vpack.c.b16 %v495, %v479
    %v528 = vpack.c.b16 %v496, %v480
    %v529 = vpack.c.b16 %v497, %v481
    %v530 = vpack.c.b16 %v498, %v482
    %v531 = vpack.c.b16 %v499, %v483
    %v532 = vpack.c.b16 %v500, %v484
    %v533 = vpack.c.b16 %v501, %v485
    %v534 = vpack.c.b16 %v502, %v486
    %v535 = vpack.c.b16 %v503, %v487
    %568 = vmatpush.bf16.xpose.msra.mxu0 0
    %569 = vmatpush.bf16.xpose.msra.mxu0 0
    %570 = vmatpush.bf16.xpose.msra.mxu0 0
    %571 = vmatpush.bf16.xpose.msra.mxu0 0
    %572 = vmatpush.bf16.xpose.msra.mxu0 0
    %573 = vmatpush.bf16.xpose.msra.mxu0 0
    %574 = vmatpush.bf16.xpose.msra.mxu0 %v520
    %575 = vmatpush.bf16.xpose.msra.mxu0 %v504
    %576 = vmatmul.bf16.gmra.mxu0 %v356
    %v577 = vpop.f32.mrf.mxu0
    %v578 = vadd.f32 %v406, %v577
    %v579 = vpop.f32.mrf.mxu0
    %580 = vdwg.mxu0
    %581 = vmatpush.bf16.xpose.msra.mxu0 0
    %582 = vmatpush.bf16.xpose.msra.mxu0 0
    %583 = vmatpush.bf16.xpose.msra.mxu0 0
    %584 = vmatpush.bf16.xpose.msra.mxu0 0
    %585 = vmatpush.bf16.xpose.msra.mxu0 0
    %586 = vmatpush.bf16.xpose.msra.mxu0 0
    %587 = vmatpush.bf16.xpose.msra.mxu0 %v521
    %588 = vmatpush.bf16.xpose.msra.mxu0 %v505
    %589 = vmatmul.bf16.gmra.mxu0 %v357
    %v590 = vpop.f32.mrf.mxu0
    %v591 = vadd.f32 %v578, %v590
    %v592 = vpop.f32.mrf.mxu0
    %593 = vdwg.mxu0
    %594 = vmatpush.bf16.xpose.msra.mxu0 0
    %595 = vmatpush.bf16.xpose.msra.mxu0 0
    %596 = vmatpush.bf16.xpose.msra.mxu0 0
    %597 = vmatpush.bf16.xpose.msra.mxu0 0
    %598 = vmatpush.bf16.xpose.msra.mxu0 0
    %599 = vmatpush.bf16.xpose.msra.mxu0 0
    %600 = vmatpush.bf16.xpose.msra.mxu0 %v522
    %601 = vmatpush.bf16.xpose.msra.mxu0 %v506
    %602 = vmatmul.bf16.gmra.mxu0 %v358
    %v603 = vpop.f32.mrf.mxu0
    %v604 = vadd.f32 %v591, %v603
    %v605 = vpop.f32.mrf.mxu0
    %606 = vdwg.mxu0
    %607 = vmatpush.bf16.xpose.msra.mxu0 0
    %608 = vmatpush.bf16.xpose.msra.mxu0 0
    %609 = vmatpush.bf16.xpose.msra.mxu0 0
    %610 = vmatpush.bf16.xpose.msra.mxu0 0
    %611 = vmatpush.bf16.xpose.msra.mxu0 0
    %612 = vmatpush.bf16.xpose.msra.mxu0 0
    %613 = vmatpush.bf16.xpose.msra.mxu0 %v523
    %614 = vmatpush.bf16.xpose.msra.mxu0 %v507
    %615 = vmatmul.bf16.gmra.mxu0 %v359
    %v616 = vpop.f32.mrf.mxu0
    %v617 = vadd.f32 %v604, %v616
    %v618 = vpop.f32.mrf.mxu0
    %619 = vdwg.mxu0
    %620 = vmatpush.bf16.xpose.msra.mxu0 0
    %621 = vmatpush.bf16.xpose.msra.mxu0 0
    %622 = vmatpush.bf16.xpose.msra.mxu0 0
    %623 = vmatpush.bf16.xpose.msra.mxu0 0
    %624 = vmatpush.bf16.xpose.msra.mxu0 0
    %625 = vmatpush.bf16.xpose.msra.mxu0 0
    %626 = vmatpush.bf16.xpose.msra.mxu0 %v524
    %627 = vmatpush.bf16.xpose.msra.mxu0 %v508
    %628 = vmatmul.bf16.gmra.mxu0 %v360
    %v629 = vpop.f32.mrf.mxu0
    %v630 = vadd.f32 %v617, %v629
    %v631 = vpop.f32.mrf.mxu0
    %632 = vdwg.mxu0
    %633 = vmatpush.bf16.xpose.msra.mxu0 0
    %634 = vmatpush.bf16.xpose.msra.mxu0 0
    %635 = vmatpush.bf16.xpose.msra.mxu0 0
    %636 = vmatpush.bf16.xpose.msra.mxu0 0
    %637 = vmatpush.bf16.xpose.msra.mxu0 0
    %638 = vmatpush.bf16.xpose.msra.mxu0 0
    %639 = vmatpush.bf16.xpose.msra.mxu0 %v525
    %640 = vmatpush.bf16.xpose.msra.mxu0 %v509
    %641 = vmatmul.bf16.gmra.mxu0 %v361
    %v642 = vpop.f32.mrf.mxu0
    %v643 = vadd.f32 %v630, %v642
    %v644 = vpop.f32.mrf.mxu0
    %645 = vdwg.mxu0
    %646 = vmatpush.bf16.xpose.msra.mxu0 0
    %647 = vmatpush.bf16.xpose.msra.mxu0 0
    %648 = vmatpush.bf16.xpose.msra.mxu0 0
    %649 = vmatpush.bf16.xpose.msra.mxu0 0
    %650 = vmatpush.bf16.xpose.msra.mxu0 0
    %651 = vmatpush.bf16.xpose.msra.mxu0 0
    %652 = vmatpush.bf16.xpose.msra.mxu0 %v526
    %653 = vmatpush.bf16.xpose.msra.mxu0 %v510
    %654 = vmatmul.bf16.gmra.mxu0 %v362
    %v655 = vpop.f32.mrf.mxu0
    %v656 = vadd.f32 %v643, %v655
    %v657 = vpop.f32.mrf.mxu0
    %658 = vdwg.mxu0
    %659 = vmatpush.bf16.xpose.msra.mxu0 0
    %660 = vmatpush.bf16.xpose.msra.mxu0 0
    %661 = vmatpush.bf16.xpose.msra.mxu0 0
    %662 = vmatpush.bf16.xpose.msra.mxu0 0
    %663 = vmatpush.bf16.xpose.msra.mxu0 0
    %664 = vmatpush.bf16.xpose.msra.mxu0 0
    %665 = vmatpush.bf16.xpose.msra.mxu0 %v527
    %666 = vmatpush.bf16.xpose.msra.mxu0 %v511
    %667 = vmatmul.bf16.gmra.mxu0 %v363
    %v668 = vpop.f32.mrf.mxu0
    %v669 = vadd.f32 %v656, %v668
    %v670 = vpop.f32.mrf.mxu0
    %671 = vdwg.mxu0
    %672 = vmatpush.bf16.xpose.msra.mxu0 0
    %673 = vmatpush.bf16.xpose.msra.mxu0 0
    %674 = vmatpush.bf16.xpose.msra.mxu0 0
    %675 = vmatpush.bf16.xpose.msra.mxu0 0
    %676 = vmatpush.bf16.xpose.msra.mxu0 0
    %677 = vmatpush.bf16.xpose.msra.mxu0 0
    %678 = vmatpush.bf16.xpose.msra.mxu0 %v528
    %679 = vmatpush.bf16.xpose.msra.mxu0 %v512
    %680 = vmatmul.bf16.gmra.mxu0 %v364
    %v681 = vpop.f32.mrf.mxu0
    %v682 = vadd.f32 %v669, %v681
    %v683 = vpop.f32.mrf.mxu0
    %684 = vdwg.mxu0
    %685 = vmatpush.bf16.xpose.msra.mxu0 0
    %686 = vmatpush.bf16.xpose.msra.mxu0 0
    %687 = vmatpush.bf16.xpose.msra.mxu0 0
    %688 = vmatpush.bf16.xpose.msra.mxu0 0
    %689 = vmatpush.bf16.xpose.msra.mxu0 0
    %690 = vmatpush.bf16.xpose.msra.mxu0 0
    %691 = vmatpush.bf16.xpose.msra.mxu0 %v529
    %692 = vmatpush.bf16.xpose.msra.mxu0 %v513
    %693 = vmatmul.bf16.gmra.mxu0 %v365
    %v694 = vpop.f32.mrf.mxu0
    %v695 = vadd.f32 %v682, %v694
    %v696 = vpop.f32.mrf.mxu0
    %697 = vdwg.mxu0
    %698 = vmatpush.bf16.xpose.msra.mxu0 0
    %699 = vmatpush.bf16.xpose.msra.mxu0 0
    %700 = vmatpush.bf16.xpose.msra.mxu0 0
    %701 = vmatpush.bf16.xpose.msra.mxu0 0
    %702 = vmatpush.bf16.xpose.msra.mxu0 0
    %703 = vmatpush.bf16.xpose.msra.mxu0 0
    %704 = vmatpush.bf16.xpose.msra.mxu0 %v530
    %705 = vmatpush.bf16.xpose.msra.mxu0 %v514
    %706 = vmatmul.bf16.gmra.mxu0 %v366
    %v707 = vpop.f32.mrf.mxu0
    %v708 = vadd.f32 %v695, %v707
    %v709 = vpop.f32.mrf.mxu0
    %710 = vdwg.mxu0
    %711 = vmatpush.bf16.xpose.msra.mxu0 0
    %712 = vmatpush.bf16.xpose.msra.mxu0 0
    %713 = vmatpush.bf16.xpose.msra.mxu0 0
    %714 = vmatpush.bf16.xpose.msra.mxu0 0
    %715 = vmatpush.bf16.xpose.msra.mxu0 0
    %716 = vmatpush.bf16.xpose.msra.mxu0 0
    %717 = vmatpush.bf16.xpose.msra.mxu0 %v531
    %718 = vmatpush.bf16.xpose.msra.mxu0 %v515
    %719 = vmatmul.bf16.gmra.mxu0 %v367
    %v720 = vpop.f32.mrf.mxu0
    %v721 = vadd.f32 %v708, %v720
    %v722 = vpop.f32.mrf.mxu0
    %723 = vdwg.mxu0
    %724 = vmatpush.bf16.xpose.msra.mxu0 0
    %725 = vmatpush.bf16.xpose.msra.mxu0 0
    %726 = vmatpush.bf16.xpose.msra.mxu0 0
    %727 = vmatpush.bf16.xpose.msra.mxu0 0
    %728 = vmatpush.bf16.xpose.msra.mxu0 0
    %729 = vmatpush.bf16.xpose.msra.mxu0 0
    %730 = vmatpush.bf16.xpose.msra.mxu0 %v532
    %731 = vmatpush.bf16.xpose.msra.mxu0 %v516
    %732 = vmatmul.bf16.gmra.mxu0 %v368
    %v733 = vpop.f32.mrf.mxu0
    %v734 = vadd.f32 %v721, %v733
    %v735 = vpop.f32.mrf.mxu0
    %736 = vdwg.mxu0
    %737 = vmatpush.bf16.xpose.msra.mxu0 0
    %738 = vmatpush.bf16.xpose.msra.mxu0 0
    %739 = vmatpush.bf16.xpose.msra.mxu0 0
    %740 = vmatpush.bf16.xpose.msra.mxu0 0
    %741 = vmatpush.bf16.xpose.msra.mxu0 0
    %742 = vmatpush.bf16.xpose.msra.mxu0 0
    %743 = vmatpush.bf16.xpose.msra.mxu0 %v533
    %744 = vmatpush.bf16.xpose.msra.mxu0 %v517
    %745 = vmatmul.bf16.gmra.mxu0 %v369
    %v746 = vpop.f32.mrf.mxu0
    %v747 = vadd.f32 %v734, %v746
    %v748 = vpop.f32.mrf.mxu0
    %749 = vdwg.mxu0
    %750 = vmatpush.bf16.xpose.msra.mxu0 0
    %751 = vmatpush.bf16.xpose.msra.mxu0 0
    %752 = vmatpush.bf16.xpose.msra.mxu0 0
    %753 = vmatpush.bf16.xpose.msra.mxu0 0
    %754 = vmatpush.bf16.xpose.msra.mxu0 0
    %755 = vmatpush.bf16.xpose.msra.mxu0 0
    %756 = vmatpush.bf16.xpose.msra.mxu0 %v534
    %757 = vmatpush.bf16.xpose.msra.mxu0 %v518
    %758 = vmatmul.bf16.gmra.mxu0 %v370
    %v759 = vpop.f32.mrf.mxu0
    %v760 = vadd.f32 %v747, %v759
    %v761 = vpop.f32.mrf.mxu0
    %762 = vdwg.mxu0
    %763 = vmatpush.bf16.xpose.msra.mxu0 0
    %764 = vmatpush.bf16.xpose.msra.mxu0 0
    %765 = vmatpush.bf16.xpose.msra.mxu0 0
    %766 = vmatpush.bf16.xpose.msra.mxu0 0
    %767 = vmatpush.bf16.xpose.msra.mxu0 0
    %768 = vmatpush.bf16.xpose.msra.mxu0 0
    %769 = vmatpush.bf16.xpose.msra.mxu0 %v535
    %770 = vmatpush.bf16.xpose.msra.mxu0 %v519
    %771 = vmatmul.bf16.gmra.mxu0 %v371
    %v772 = vpop.f32.mrf.mxu0
    %v773 = vadd.f32 %v760, %v772
    %v774 = vpop.f32.mrf.mxu0
    %775 = vdwg.mxu0
    %v776 = vmax.f32 %v773, 0.0
    %vm777 = vcmask 254976
    %778 = vst.msk [vmem:[#allocation3] sm:$0x3] %vm777, %v776
    // Predicated region
    $region22: #{flattened_cnn_encoder.1} parent=1 // pred_check
      _
    $region23: #{flattened_cnn_encoder.1} parent=1 // pred_check_branch
      %780 = sbr.rel (0) target = $region25
    $region24: #{flattened_cnn_encoder.1} parent=1 // pred_region
      %782 = vsyncadd [#allocation4], 0
      %s784 = sshll.u32 [#allocation3], 4
      %s785 = int_to_ptr.vmem [resolvable:$true] %s784
      %s786 = sshll.u32 %s5, 4
      %s787 = int_to_ptr.hbm [resolvable:$true] %s786
      %789 = dma.vmem_to_hbm [thread:$0]  %s785, 32, %s787, [#allocation4]
    $region25: #{flattened_cnn_encoder.1} parent=1 // pred_fallthru
      _
    // Predicated region
    $region26: #{flattened_cnn_encoder.1} parent=1 // pred_check
      _
    $region27: #{flattened_cnn_encoder.1} parent=1 // pred_check_branch
      %791 = sbr.rel (0) target = $region29
    $region28: #{flattened_cnn_encoder.1} parent=1 // pred_region
      %793 = dma.done [#allocation4], 32
    $region29: #{flattened_cnn_encoder.1} parent=1 // pred_fallthru
      _
    %794 = vsyncpa [#allocation4], 1

</llo_original>
